<compile_context>
chip_gen: v6e
topology: v6e:2x2x1
jax: 0.10.0
libtpu: 0.0.40
codegen_flags: <defaults>
</compile_context>

<pallas_src>
import math
from functools import partial

import jax
import jax.numpy as jnp
from jax.experimental import pallas as pl
from jax.experimental.pallas import tpu as pltpu


# ---------------------------------------------------------------------------
# Kernel 1: Q/K/V projections + per-head squared query norm (lane-dense)
# ---------------------------------------------------------------------------
def _qkv_norm_kernel(xq_ref, xk_ref, xv_ref,
                     wq_ref, wk_ref, wv_ref,
                     bq_ref, bk_ref, bv_ref,
                     hmask_ref,
                     q_ref, k_ref, v_ref, qn_ref):
    # Q projection in f32: its squared norm drives top-k selection and must
    # match the f32 reference (bf16 could flip near-tie index choices).
    q = (jnp.dot(xq_ref[0], wq_ref[...], preferred_element_type=jnp.float32)
         + bq_ref[...])                                               # (TL, D) f32

    # Per-head squared L2 norm of every query row as ONE matmul with the 0/1
    # head mask (H, D), contracting the D (lane) axis of both operands.
    # Output is (H, TL): TL on the lane axis -> unmasked lane-dense store.
    qn_ref[0] = jax.lax.dot_general(
        hmask_ref[...], q * q, (((1,), (1,)), ((), ())),
        preferred_element_type=jnp.float32)                           # (H, TL)

    q_ref[0] = q.astype(jnp.bfloat16)                                 # lane-dense store

    # K / V projections on the bf16 MXU path; activations cast in-kernel so
    # HBM input traffic stays a single f32 read.
    k = (jnp.dot(xk_ref[0].astype(jnp.bfloat16), wk_ref[...],
                 preferred_element_type=jnp.float32) + bk_ref[...])
    v = (jnp.dot(xv_ref[0].astype(jnp.bfloat16), wv_ref[...],
                 preferred_element_type=jnp.float32) + bv_ref[...])
    k_ref[0] = k.astype(jnp.bfloat16)
    v_ref[0] = v.astype(jnp.bfloat16)


# ---------------------------------------------------------------------------
# Kernel 2: prob-sparse attention for one batch (all heads) + out projection
# ---------------------------------------------------------------------------
def _sparse_attn_kernel(idx_ref, q_ref, k_ref, v_ref, wo_ref, bo_ref,
                        o_ref, ctx_scr, *, n_heads, d_k, u_part):
    seq_len = q_ref.shape[1]
    scale = 1.0 / (d_k ** 0.5)
    idx_all = idx_ref[0]                                              # (H, U) int32
    iota_l = jax.lax.broadcasted_iota(jnp.int32, (seq_len, u_part), 0)

    for h in range(n_heads):
        sl = slice(h * d_k, (h + 1) * d_k)
        idx_h = idx_all[h:h + 1, :]                                   # (1, U)
        # selT[l, u] = 1 iff row l is the u-th selected query of head h.
        selT = (iota_l == idx_h).astype(jnp.bfloat16)                 # (L, U)

        def gather(ref):
            # (U, d_k) = selT^T @ x_h : exact row gather (top-k idx unique).
            return jax.lax.dot_general(
                selT, ref[0, :, sl], (((0,), (0,)), ((), ())),
                preferred_element_type=jnp.float32)

        qs = gather(q_ref)
        ks = gather(k_ref)
        vs = gather(v_ref)

        # scores = qs @ ks^T on the bf16 MXU (exact bf16 round-trip of the
        # gathered values), scale + softmax kept in f32.
        s = jax.lax.dot_general(
            qs.astype(jnp.bfloat16), ks.astype(jnp.bfloat16),
            (((1,), (1,)), ((), ())),
            preferred_element_type=jnp.float32) * scale               # (U, U)
        s = s - jnp.max(s, axis=-1, keepdims=True)
        p = jnp.exp(s)
        attn = p * pl.reciprocal(jnp.sum(p, axis=-1, keepdims=True), approx=True)
        # TODO(synk): nn.Dropout(0.1) on attn is identity in eval mode; train-mode dropout not implemented.

        ctx = jnp.dot(attn.astype(jnp.bfloat16), vs.astype(jnp.bfloat16),
                      preferred_element_type=jnp.float32)             # (U, d_k)

        # Recompute selT right before the scatter so it need not stay live
        # across the whole head body (caps vreg pressure; CSE is harmless).
        selT_s = (iota_l == idx_h).astype(jnp.bfloat16)
        # Scatter back to length L and store straight into the resident
        # (L, D) bf16 scratch slice for this head (no ctx list + concat).
        ctx_scr[:, sl] = jnp.dot(
            selT_s, ctx.astype(jnp.bfloat16),
            preferred_element_type=jnp.float32).astype(jnp.bfloat16)

    # Fused output projection (bf16 MXU, f32 accumulate + f32 bias);
    # the lane-dense (L, D) f32 store is the only HBM output.
    o_ref[0] = (jnp.dot(ctx_scr[...], wo_ref[...],
                        preferred_element_type=jnp.float32) + bo_ref[...])


# ---------------------------------------------------------------------------
# Wrapper
# ---------------------------------------------------------------------------
def _pick_seq_tile(L):
    if L <= 512:
        return L
    for t in (512, 256, 128):
        if L % t == 0:
            return t
    return L


def prob_sparse_self_attention(queries, keys, values, params, n_heads):
    B, L, D = queries.shape
    d_k = D // n_heads
    u_part = max(1, int(L * 0.5))

    # bf16 weights for the MXU; the Q weight stays f32 (feeds top-k statistic).
    wq = params["wq"].astype(jnp.float32)
    wk_bf = params["wk"].astype(jnp.bfloat16)
    wv_bf = params["wv"].astype(jnp.bfloat16)
    wo_bf = params["wo"].astype(jnp.bfloat16)
    bq2 = params["bq"].reshape(1, D).astype(jnp.float32)
    bk2 = params["bk"].reshape(1, D).astype(jnp.float32)
    bv2 = params["bv"].reshape(1, D).astype(jnp.float32)
    bo2 = params["bo"].reshape(1, D).astype(jnp.float32)

    # 0/1 head mask (H, D): row h selects the d_k features of head h.
    hmask = (jnp.arange(n_heads)[:, None]
             == (jnp.arange(D)[None, :] // d_k)).astype(jnp.float32)

    TL = _pick_seq_tile(L)
    n_l = pl.cdiv(L, TL)

    # Raise the scoped VMEM limit (default 16/32 MiB is unnecessarily small on
    # v5e/v6e); cap at 3/4 of physical so it stays safe on v7x's 64 MiB.
    try:
        vmem_cap = pltpu.get_tpu_info().vmem_capacity_bytes
    except Exception:
        vmem_cap = 64 * 1024 * 1024
    vmem_limit = max(32 * 1024 * 1024,
                     min(int(vmem_cap) * 3 // 4, 100 * 1024 * 1024))

    seq_in_spec = pl.BlockSpec((1, TL, D), lambda b, l: (b, l, 0))
    w_spec1 = pl.BlockSpec((D, D), lambda b, l: (0, 0))
    b_spec1 = pl.BlockSpec((1, D), lambda b, l: (0, 0))

    cost1 = pl.CostEstimate(
        flops=int(B * L * (6 * D * D + 2 * D * n_heads + D)),
        transcendentals=0,
        bytes_accessed=int(3 * B * L * D * 4 + D * D * 8
                           + 3 * B * L * D * 2 + B * n_heads * L * 4))

    # --- Stage 1: projections + per-head squared query norm ---------------
    q_bf, k_bf, v_bf, qn = pl.pallas_call(
        _qkv_norm_kernel,
        grid=(B, n_l),
        in_specs=[seq_in_spec, seq_in_spec, seq_in_spec,
                  w_spec1, w_spec1, w_spec1,
                  b_spec1, b_spec1, b_spec1,
                  pl.BlockSpec((n_heads, D), lambda b, l: (0, 0))],
        out_specs=[pl.BlockSpec((1, TL, D), lambda b, l: (b, l, 0)),
                   pl.BlockSpec((1, TL, D), lambda b, l: (b, l, 0)),
                   pl.BlockSpec((1, TL, D), lambda b, l: (b, l, 0)),
                   pl.BlockSpec((1, n_heads, TL), lambda b, l: (b, 0, l))],
        out_shape=(jax.ShapeDtypeStruct((B, L, D), jnp.bfloat16),
                   jax.ShapeDtypeStruct((B, L, D), jnp.bfloat16),
                   jax.ShapeDtypeStruct((B, L, D), jnp.bfloat16),
                   jax.ShapeDtypeStruct((B, n_heads, L), jnp.float32)),
        compiler_params=pltpu.CompilerParams(
            dimension_semantics=("parallel", "parallel"),
            vmem_limit_bytes=vmem_limit),
        cost_estimate=cost1,
    )(queries, keys, values, wq, wk_bf, wv_bf, bq2, bk2, bv2, hmask)

    # --- Stage 2 (glue): top-k over the lane-dense norms -------------------
    # TODO(synk): top-k (sorting) has no clean Pallas TPU primitive; done in JAX glue.
    _, idx = jax.lax.top_k(qn, u_part)            # (B, H, U) int32, no transposes

    cost2 = pl.CostEstimate(
        flops=int(B * (n_heads * (8 * L * u_part * d_k
                                  + 4 * u_part * u_part * d_k)
                       + 2 * L * D * D)),
        transcendentals=int(B * n_heads * (u_part * u_part + u_part)),
        bytes_accessed=int(3 * B * L * D * 2 + B * n_heads * u_part * 4
                           + D * D * 2 + D * 4 + B * L * D * 4))

    # --- Stage 3: sparse attention + fused output projection, per batch ----
    out = pl.pallas_call(
        partial(_sparse_attn_kernel, n_heads=n_heads, d_k=d_k, u_part=u_part),
        grid=(B,),
        in_specs=[pl.BlockSpec((1, n_heads, u_part), lambda b: (b, 0, 0)),
                  pl.BlockSpec((1, L, D), lambda b: (b, 0, 0)),
                  pl.BlockSpec((1, L, D), lambda b: (b, 0, 0)),
                  pl.BlockSpec((1, L, D), lambda b: (b, 0, 0)),
                  pl.BlockSpec((D, D), lambda b: (0, 0)),
                  pl.BlockSpec((1, D), lambda b: (0, 0))],
        out_specs=pl.BlockSpec((1, L, D), lambda b: (b, 0, 0)),
        out_shape=jax.ShapeDtypeStruct((B, L, D), jnp.float32),
        scratch_shapes=[pltpu.VMEM((L, D), jnp.bfloat16)],
        compiler_params=pltpu.CompilerParams(
            dimension_semantics=("parallel",),
            vmem_limit_bytes=vmem_limit),
        cost_estimate=cost2,
    )(idx, q_bf, k_bf, v_bf, wo_bf, bo2)
    return out


# ---------------------------------------------------------------------------
# Pure-JAX reference (mirrors the PyTorch forward, eval mode, f32)
# ---------------------------------------------------------------------------
def reference(queries, keys, values, params, n_heads):
    B, L, D = queries.shape
    d_k = D // n_heads
    u_part = max(1, int(L * 0.5))
    q = queries @ params["wq"] + params["bq"]
    k = keys @ params["wk"] + params["bk"]
    v = values @ params["wv"] + params["bv"]
    q4 = q.reshape(B, L, n_heads, d_k).transpose(0, 2, 1, 3)
    k4 = k.reshape(B, L, n_heads, d_k).transpose(0, 2, 1, 3)
    v4 = v.reshape(B, L, n_heads, d_k).transpose(0, 2, 1, 3)
    qn = jnp.sqrt(jnp.sum(q4 * q4, axis=-1))
    _, idx = jax.lax.top_k(qn, u_part)
    gather = lambda t: jnp.take_along_axis(t, idx[..., None], axis=2)
    qs, ks, vs = gather(q4), gather(k4), gather(v4)
    scores = jnp.einsum("bhud,bhwd->bhuw", qs, ks) / (d_k ** 0.5)
    attn = jax.nn.softmax(scores, axis=-1)
    ctx = jnp.einsum("bhuw,bhwd->bhud", attn, vs)
    sel = jax.nn.one_hot(idx, L, dtype=ctx.dtype)      # (B, H, U, L)
    full = jnp.einsum("bhul,bhud->bhld", sel, ctx)     # scatter (indices unique)
    ctx2 = full.transpose(0, 2, 1, 3).reshape(B, L, D)
    return ctx2 @ params["wo"] + params["bo"]


if __name__ == "__main__":
    B, L, D, H = 2, 8, 32, 4

    key = jax.random.PRNGKey(0)
    kq, kk, kv, kp = jax.random.split(key, 4)
    queries = jax.random.normal(kq, (B, L, D), dtype=jnp.float32)
    keys_in = jax.random.normal(kk, (B, L, D), dtype=jnp.float32)
    values = jax.random.normal(kv, (B, L, D), dtype=jnp.float32)

    pkeys = jax.random.split(kp, 8)
    s = 1.0 / math.sqrt(D)
    params = {
        "wq": jax.random.uniform(pkeys[0], (D, D), jnp.float32, -s, s),
        "bq": jax.random.uniform(pkeys[1], (D,), jnp.float32, -s, s),
        "wk": jax.random.uniform(pkeys[2], (D, D), jnp.float32, -s, s),
        "bk": jax.random.uniform(pkeys[3], (D,), jnp.float32, -s, s),
        "wv": jax.random.uniform(pkeys[4], (D, D), jnp.float32, -s, s),
        "bv": jax.random.uniform(pkeys[5], (D,), jnp.float32, -s, s),
        "wo": jax.random.uniform(pkeys[6], (D, D), jnp.float32, -s, s),
        "bo": jax.random.uniform(pkeys[7], (D,), jnp.float32, -s, s),
    }

    out = prob_sparse_self_attention(queries, keys_in, values, params, H)
    out = jax.block_until_ready(out)

    ref = reference(queries, keys_in, values, params, H)
    if not jnp.allclose(out, ref, atol=2e-2, rtol=2e-2):
        diff = float(jnp.max(jnp.abs(out - ref)))
        raise AssertionError(f"Pallas output does not match JAX reference (max abs diff {diff})")

    print("KERNEL_OK")
</pallas_src>

<mosaic_0001>
module attributes {stable_mosaic.version = 11 : i64} {
  func.func @_qkv_norm_kernel(%arg0: i32, %arg1: i32, %arg2: memref<1x8x32xf32, #tpu.memory_space<vmem>>, %arg3: memref<1x8x32xf32, #tpu.memory_space<vmem>>, %arg4: memref<1x8x32xf32, #tpu.memory_space<vmem>>, %arg5: memref<32x32xf32, #tpu.memory_space<vmem>>, %arg6: memref<32x32xbf16, #tpu.memory_space<vmem>>, %arg7: memref<32x32xbf16, #tpu.memory_space<vmem>>, %arg8: memref<1x32xf32, #tpu.memory_space<vmem>>, %arg9: memref<1x32xf32, #tpu.memory_space<vmem>>, %arg10: memref<1x32xf32, #tpu.memory_space<vmem>>, %arg11: memref<4x32xf32, #tpu.memory_space<vmem>>, %arg12: memref<1x8x32xbf16, #tpu.memory_space<vmem>>, %arg13: memref<1x8x32xbf16, #tpu.memory_space<vmem>>, %arg14: memref<1x8x32xbf16, #tpu.memory_space<vmem>>, %arg15: memref<1x4x8xf32, #tpu.memory_space<vmem>>) attributes {dimension_semantics = [#tpu.dimension_semantics<parallel>, #tpu.dimension_semantics<parallel>], iteration_bounds = array<i64: 2, 1>, scalar_prefetch = 0 : i64, scratch_operands = 0 : i64, tpu.core_type = #tpu.core_type<tc>, window_params = [{transform_indices = @transform_0, window_bounds = array<i64: 1, 8, 32>}, {transform_indices = @transform_1, window_bounds = array<i64: 1, 8, 32>}, {transform_indices = @transform_2, window_bounds = array<i64: 1, 8, 32>}, {pipeline_mode = #tpu.pipeline_mode<synchronous>, transform_indices = @transform_3, window_bounds = array<i64: 32, 32>}, {pipeline_mode = #tpu.pipeline_mode<synchronous>, transform_indices = @transform_4, window_bounds = array<i64: 32, 32>}, {pipeline_mode = #tpu.pipeline_mode<synchronous>, transform_indices = @transform_5, window_bounds = array<i64: 32, 32>}, {pipeline_mode = #tpu.pipeline_mode<synchronous>, transform_indices = @transform_6, window_bounds = array<i64: 1, 32>}, {pipeline_mode = #tpu.pipeline_mode<synchronous>, transform_indices = @transform_7, window_bounds = array<i64: 1, 32>}, {pipeline_mode = #tpu.pipeline_mode<synchronous>, transform_indices = @transform_8, window_bounds = array<i64: 1, 32>}, {pipeline_mode = #tpu.pipeline_mode<synchronous>, transform_indices = @transform_9, window_bounds = array<i64: 4, 32>}, {transform_indices = @transform_10, window_bounds = array<i64: 1, 8, 32>}, {transform_indices = @transform_11, window_bounds = array<i64: 1, 8, 32>}, {transform_indices = @transform_12, window_bounds = array<i64: 1, 8, 32>}, {transform_indices = @transform_13, window_bounds = array<i64: 1, 4, 8>}]} {
    %c0 = arith.constant 0 : index
    %c0_0 = arith.constant 0 : index
    %c0_1 = arith.constant 0 : index
    %0 = vector.load %arg2[%c0, %c0_0, %c0_1] : memref<1x8x32xf32, #tpu.memory_space<vmem>>, vector<1x8x32xf32>
    %1 = vector.shape_cast %0 : vector<1x8x32xf32> to vector<8x32xf32>
    %c0_2 = arith.constant 0 : index
    %c0_3 = arith.constant 0 : index
    %2 = vector.load %arg5[%c0_2, %c0_3] : memref<32x32xf32, #tpu.memory_space<vmem>>, vector<32x32xf32>
    %cst = arith.constant dense<0.000000e+00> : vector<8x32xf32>
    %3 = tpu.matmul %1, %2, %cst {dimension_numbers = #tpu.dot_dimension_numbers<[1], [0], [0], [1], [0, 0, 1, 1], [], []>} : vector<8x32xf32>, vector<32x32xf32>, vector<8x32xf32> -> vector<8x32xf32>
    %c0_4 = arith.constant 0 : index
    %c0_5 = arith.constant 0 : index
    %4 = vector.load %arg8[%c0_4, %c0_5] : memref<1x32xf32, #tpu.memory_space<vmem>>, vector<1x32xf32>
    %5 = vector.broadcast %4 : vector<1x32xf32> to vector<8x32xf32>
    %6 = arith.addf %3, %5 : vector<8x32xf32>
    %c0_6 = arith.constant 0 : index
    %c0_7 = arith.constant 0 : index
    %7 = vector.load %arg11[%c0_6, %c0_7] : memref<4x32xf32, #tpu.memory_space<vmem>>, vector<4x32xf32>
    %8 = arith.mulf %6, %6 : vector<8x32xf32>
    %cst_8 = arith.constant dense<0.000000e+00> : vector<4x8xf32>
    %9 = tpu.matmul %7, %8, %cst_8 {dimension_numbers = #tpu.dot_dimension_numbers<[1], [1], [0], [0], [0, 0, 1, 0], [], []>} : vector<4x32xf32>, vector<8x32xf32>, vector<4x8xf32> -> vector<4x8xf32>
    %c0_9 = arith.constant 0 : index
    %c0_10 = arith.constant 0 : index
    %c0_11 = arith.constant 0 : index
    %10 = vector.load %arg15[%c0_9, %c0_10, %c0_11] : memref<1x4x8xf32, #tpu.memory_space<vmem>>, vector<1x4x8xf32>
    %11 = vector.shape_cast %10 : vector<1x4x8xf32> to vector<4x8xf32>
    %12 = vector.shape_cast %9 : vector<4x8xf32> to vector<1x4x8xf32>
    tpu.vector_store %arg15[%c0_9, %c0_10, %c0_11], %12 {strides = array<i32>} : memref<1x4x8xf32, #tpu.memory_space<vmem>>, vector<1x4x8xf32>,
    %13 = arith.truncf %6 : vector<8x32xf32> to vector<8x32xbf16>
    %c0_12 = arith.constant 0 : index
    %c0_13 = arith.constant 0 : index
    %c0_14 = arith.constant 0 : index
    %14 = vector.load %arg12[%c0_12, %c0_13, %c0_14] : memref<1x8x32xbf16, #tpu.memory_space<vmem>>, vector<1x8x32xbf16>
    %15 = vector.shape_cast %14 : vector<1x8x32xbf16> to vector<8x32xbf16>
    %16 = vector.shape_cast %13 : vector<8x32xbf16> to vector<1x8x32xbf16>
    tpu.vector_store %arg12[%c0_12, %c0_13, %c0_14], %16 {strides = array<i32>} : memref<1x8x32xbf16, #tpu.memory_space<vmem>>, vector<1x8x32xbf16>,
    %c0_15 = arith.constant 0 : index
    %c0_16 = arith.constant 0 : index
    %c0_17 = arith.constant 0 : index
    %17 = vector.load %arg3[%c0_15, %c0_16, %c0_17] : memref<1x8x32xf32, #tpu.memory_space<vmem>>, vector<1x8x32xf32>
    %18 = vector.shape_cast %17 : vector<1x8x32xf32> to vector<8x32xf32>
    %19 = arith.truncf %18 : vector<8x32xf32> to vector<8x32xbf16>
    %c0_18 = arith.constant 0 : index
    %c0_19 = arith.constant 0 : index
    %20 = vector.load %arg6[%c0_18, %c0_19] : memref<32x32xbf16, #tpu.memory_space<vmem>>, vector<32x32xbf16>
    %cst_20 = arith.constant dense<0.000000e+00> : vector<8x32xf32>
    %21 = tpu.matmul %19, %20, %cst_20 {dimension_numbers = #tpu.dot_dimension_numbers<[1], [0], [0], [1], [0, 0, 1, 1], [], []>} : vector<8x32xbf16>, vector<32x32xbf16>, vector<8x32xf32> -> vector<8x32xf32>
    %c0_21 = arith.constant 0 : index
    %c0_22 = arith.constant 0 : index
    %22 = vector.load %arg9[%c0_21, %c0_22] : memref<1x32xf32, #tpu.memory_space<vmem>>, vector<1x32xf32>
    %23 = vector.broadcast %22 : vector<1x32xf32> to vector<8x32xf32>
    %24 = arith.addf %21, %23 : vector<8x32xf32>
    %c0_23 = arith.constant 0 : index
    %c0_24 = arith.constant 0 : index
    %c0_25 = arith.constant 0 : index
    %25 = vector.load %arg4[%c0_23, %c0_24, %c0_25] : memref<1x8x32xf32, #tpu.memory_space<vmem>>, vector<1x8x32xf32>
    %26 = vector.shape_cast %25 : vector<1x8x32xf32> to vector<8x32xf32>
    %27 = arith.truncf %26 : vector<8x32xf32> to vector<8x32xbf16>
    %c0_26 = arith.constant 0 : index
    %c0_27 = arith.constant 0 : index
    %28 = vector.load %arg7[%c0_26, %c0_27] : memref<32x32xbf16, #tpu.memory_space<vmem>>, vector<32x32xbf16>
    %cst_28 = arith.constant dense<0.000000e+00> : vector<8x32xf32>
    %29 = tpu.matmul %27, %28, %cst_28 {dimension_numbers = #tpu.dot_dimension_numbers<[1], [0], [0], [1], [0, 0, 1, 1], [], []>} : vector<8x32xbf16>, vector<32x32xbf16>, vector<8x32xf32> -> vector<8x32xf32>
    %c0_29 = arith.constant 0 : index
    %c0_30 = arith.constant 0 : index
    %30 = vector.load %arg10[%c0_29, %c0_30] : memref<1x32xf32, #tpu.memory_space<vmem>>, vector<1x32xf32>
    %31 = vector.broadcast %30 : vector<1x32xf32> to vector<8x32xf32>
    %32 = arith.addf %29, %31 : vector<8x32xf32>
    %33 = arith.truncf %24 : vector<8x32xf32> to vector<8x32xbf16>
    %c0_31 = arith.constant 0 : index
    %c0_32 = arith.constant 0 : index
    %c0_33 = arith.constant 0 : index
    %34 = vector.load %arg13[%c0_31, %c0_32, %c0_33] : memref<1x8x32xbf16, #tpu.memory_space<vmem>>, vector<1x8x32xbf16>
    %35 = vector.shape_cast %34 : vector<1x8x32xbf16> to vector<8x32xbf16>
    %36 = vector.shape_cast %33 : vector<8x32xbf16> to vector<1x8x32xbf16>
    tpu.vector_store %arg13[%c0_31, %c0_32, %c0_33], %36 {strides = array<i32>} : memref<1x8x32xbf16, #tpu.memory_space<vmem>>, vector<1x8x32xbf16>,
    %37 = arith.truncf %32 : vector<8x32xf32> to vector<8x32xbf16>
    %c0_34 = arith.constant 0 : index
    %c0_35 = arith.constant 0 : index
    %c0_36 = arith.constant 0 : index
    %38 = vector.load %arg14[%c0_34, %c0_35, %c0_36] : memref<1x8x32xbf16, #tpu.memory_space<vmem>>, vector<1x8x32xbf16>
    %39 = vector.shape_cast %38 : vector<1x8x32xbf16> to vector<8x32xbf16>
    %40 = vector.shape_cast %37 : vector<8x32xbf16> to vector<1x8x32xbf16>
    tpu.vector_store %arg14[%c0_34, %c0_35, %c0_36], %40 {strides = array<i32>} : memref<1x8x32xbf16, #tpu.memory_space<vmem>>, vector<1x8x32xbf16>,
    return
  }
  func.func @transform_0(%arg0: i32, %arg1: i32) -> (i32, i32, i32) {
    %c0_i32 = arith.constant 0 : i32
    %c0_i32_0 = arith.constant 0 : i32
    return %arg0, %arg1, %c0_i32 : i32, i32, i32
  }
  func.func @transform_1(%arg0: i32, %arg1: i32) -> (i32, i32, i32) {
    %c0_i32 = arith.constant 0 : i32
    %c0_i32_0 = arith.constant 0 : i32
    return %arg0, %arg1, %c0_i32 : i32, i32, i32
  }
  func.func @transform_2(%arg0: i32, %arg1: i32) -> (i32, i32, i32) {
    %c0_i32 = arith.constant 0 : i32
    %c0_i32_0 = arith.constant 0 : i32
    return %arg0, %arg1, %c0_i32 : i32, i32, i32
  }
  func.func @transform_3(%arg0: i32, %arg1: i32) -> (i32, i32) {
    %c0_i32 = arith.constant 0 : i32
    %c0_i32_0 = arith.constant 0 : i32
    %c0_i32_1 = arith.constant 0 : i32
    return %c0_i32, %c0_i32_0 : i32, i32
  }
  func.func @transform_4(%arg0: i32, %arg1: i32) -> (i32, i32) {
    %c0_i32 = arith.constant 0 : i32
    %c0_i32_0 = arith.constant 0 : i32
    %c0_i32_1 = arith.constant 0 : i32
    return %c0_i32, %c0_i32_0 : i32, i32
  }
  func.func @transform_5(%arg0: i32, %arg1: i32) -> (i32, i32) {
    %c0_i32 = arith.constant 0 : i32
    %c0_i32_0 = arith.constant 0 : i32
    %c0_i32_1 = arith.constant 0 : i32
    return %c0_i32, %c0_i32_0 : i32, i32
  }
  func.func @transform_6(%arg0: i32, %arg1: i32) -> (i32, i32) {
    %c0_i32 = arith.constant 0 : i32
    %c0_i32_0 = arith.constant 0 : i32
    %c0_i32_1 = arith.constant 0 : i32
    return %c0_i32, %c0_i32_0 : i32, i32
  }
  func.func @transform_7(%arg0: i32, %arg1: i32) -> (i32, i32) {
    %c0_i32 = arith.constant 0 : i32
    %c0_i32_0 = arith.constant 0 : i32
    %c0_i32_1 = arith.constant 0 : i32
    return %c0_i32, %c0_i32_0 : i32, i32
  }
  func.func @transform_8(%arg0: i32, %arg1: i32) -> (i32, i32) {
    %c0_i32 = arith.constant 0 : i32
    %c0_i32_0 = arith.constant 0 : i32
    %c0_i32_1 = arith.constant 0 : i32
    return %c0_i32, %c0_i32_0 : i32, i32
  }
  func.func @transform_9(%arg0: i32, %arg1: i32) -> (i32, i32) {
    %c0_i32 = arith.constant 0 : i32
    %c0_i32_0 = arith.constant 0 : i32
    %c0_i32_1 = arith.constant 0 : i32
    return %c0_i32, %c0_i32_0 : i32, i32
  }
  func.func @transform_10(%arg0: i32, %arg1: i32) -> (i32, i32, i32) {
    %c0_i32 = arith.constant 0 : i32
    %c0_i32_0 = arith.constant 0 : i32
    return %arg0, %arg1, %c0_i32 : i32, i32, i32
  }
  func.func @transform_11(%arg0: i32, %arg1: i32) -> (i32, i32, i32) {
    %c0_i32 = arith.constant 0 : i32
    %c0_i32_0 = arith.constant 0 : i32
    return %arg0, %arg1, %c0_i32 : i32, i32, i32
  }
  func.func @transform_12(%arg0: i32, %arg1: i32) -> (i32, i32, i32) {
    %c0_i32 = arith.constant 0 : i32
    %c0_i32_0 = arith.constant 0 : i32
    return %arg0, %arg1, %c0_i32 : i32, i32, i32
  }
  func.func @transform_13(%arg0: i32, %arg1: i32) -> (i32, i32, i32) {
    %c0_i32 = arith.constant 0 : i32
    %c0_i32_0 = arith.constant 0 : i32
    return %arg0, %c0_i32, %arg1 : i32, i32, i32
  }
}

</mosaic_0001>

<llo_original>
// kernel: tpu_custom_call.1
$region0: #{tpu_custom_call.1}
  #allocation0 [shape = 'u32[]', space=smem, size = 0x4, offset = 0x4, fixed_abs, tag = 'smem constant byte address 0x4 - core index']
  #allocation1 [shape = 'u32[144,128]{1,0:T(1,128)}', space=vmem, size = 0x12000, scoped, tag = 'internal scratch']
  %s0 = inlined_call_operand.hbm [shape: f32[2,8,32], index: 0, kind: input, shape index: {}]
  %s1 = inlined_call_operand.hbm [shape: f32[2,8,32], index: 1, kind: input, shape index: {}]
  %s2 = inlined_call_operand.hbm [shape: f32[2,8,32], index: 2, kind: input, shape index: {}]
  %s3 = inlined_call_operand.hbm [shape: f32[32,32], index: 3, kind: input, shape index: {}]
  %s4 = inlined_call_operand.hbm [shape: bf16[32,32], index: 4, kind: input, shape index: {}]
  %s5 = inlined_call_operand.hbm [shape: bf16[32,32], index: 5, kind: input, shape index: {}]
  %s6 = inlined_call_operand.vmem [shape: f32[1,32], index: 6, kind: input, shape index: {}]
  %s7 = inlined_call_operand.vmem [shape: f32[1,32], index: 7, kind: input, shape index: {}]
  %s8 = inlined_call_operand.vmem [shape: f32[1,32], index: 8, kind: input, shape index: {}]
  %s9 = inlined_call_operand.vmem [shape: f32[4,32], index: 9, kind: input, shape index: {}]
  %s10 = inlined_call_operand.hbm [shape: bf16[2,8,32], index: 10, kind: output, shape index: {0}]
  %s11 = inlined_call_operand.hbm [shape: bf16[2,8,32], index: 11, kind: output, shape index: {1}]
  %s12 = inlined_call_operand.hbm [shape: bf16[2,8,32], index: 12, kind: output, shape index: {2}]
  %s13 = inlined_call_operand.hbm [shape: f32[2,4,8], index: 13, kind: output, shape index: {3}]
  %14 = xla_tuple %s10, %s11, %s12, %s13
  %s15 = sld [smem:[#allocation0]]
  $region121: #{tpu_custom_call.1} parent=0
    _
  %s17 = ssub.s32 1, %s15
  %s18 = scalar_select 0, %s17, %s15
  $region1: #{tpu_custom_call.1} parent=0
    #allocation2 [shape = 'u8[8192]{0}', space=vmem, size = 0x2000, scoped, tag = 'input window, operand 0']
    #allocation3 [shape = 's32[2]{0}', space=sflag, size = 0x8, scoped, tag = 'scoped memory for tpu_custom_call.1']
    #allocation4 [shape = 's32[2]{0}', space=sflag, size = 0x8, scoped, tag = 'scoped memory for tpu_custom_call.1']
    #allocation5 [shape = 'u8[8192]{0}', space=vmem, size = 0x2000, scoped, tag = 'input window, operand 1']
    #allocation6 [shape = 's32[2]{0}', space=sflag, size = 0x8, scoped, tag = 'scoped memory for tpu_custom_call.1']
    #allocation7 [shape = 'u8[8192]{0}', space=vmem, size = 0x2000, scoped, tag = 'input window, operand 2']
    #allocation8 [shape = 'u8[16384]{0}', space=vmem, size = 0x4000, scoped, tag = 'input window, operand 3, single buffered']
    #allocation9 [shape = 's32[1]{0}', space=sflag, size = 0x4, scoped, tag = 'scoped memory for tpu_custom_call.1']
    #allocation10 [shape = 'u8[8192]{0}', space=vmem, size = 0x2000, scoped, tag = 'input window, operand 4, single buffered']
    #allocation11 [shape = 'u8[8192]{0}', space=vmem, size = 0x2000, scoped, tag = 'input window, operand 5, single buffered']
    #allocation12 [shape = 's32[1]{0}', space=sflag, size = 0x4, scoped, tag = 'scoped memory for tpu_custom_call.1']
    #allocation13 [shape = 'u8[4096]{0}', space=vmem, size = 0x1000, scoped, tag = 'output window, operand 0']
    #allocation14 [shape = 'u8[4096]{0}', space=vmem, size = 0x1000, scoped, tag = 'output window, operand 1']
    #allocation15 [shape = 's32[2]{0}', space=sflag, size = 0x8, scoped, tag = 'scoped memory for tpu_custom_call.1']
    #allocation16 [shape = 'u8[4096]{0}', space=vmem, size = 0x1000, scoped, tag = 'output window, operand 2']
    #allocation17 [shape = 'u8[4096]{0}', space=vmem, size = 0x1000, scoped, tag = 'output window, operand 3']
    #allocation18 [shape = 's32[2]{0}', space=sflag, size = 0x8, scoped, tag = 'scoped memory for tpu_custom_call.1']
    %19 = vsyncpa [#allocation3], 0
    %s20 = scalar_lea.sflag [#allocation3], 1
    %21 = vsyncpa %s20, 0
    %22 = vsyncpa [#allocation6], 0
    %s23 = scalar_lea.sflag [#allocation6], 1
    %24 = vsyncpa %s23, 0
    %25 = vsyncpa [#allocation9], 0
    %26 = vsyncpa [#allocation12], 0
    %27 = vsyncpa [#allocation4], 0
    %s28 = scalar_lea.sflag [#allocation4], 1
    %29 = vsyncpa %s28, 0
    %30 = vsyncpa [#allocation15], 0
    %s31 = scalar_lea.sflag [#allocation15], 1
    %32 = vsyncpa %s31, 0
    %33 = vsyncpa [#allocation18], 0
    %s34 = scalar_lea.sflag [#allocation18], 1
    %35 = vsyncpa %s34, 0
    loop: start=0, step=1, limit=4
    $region2: #{tpu_custom_call.1} parent=1 // loop_pre_header
      _
    $region3: #{tpu_custom_call.1} parent=1 // loop_header
      %s37 = sphi 0, %s41
      %p38 = scmp.ge.s32.totalorder %s37, 4
      %s44 = sphi 0, %s56
      %s45 = sphi 0, %s52
      %s46 = sphi 0, %s44
      %s47 = sphi 0, %s45
      %s48 = sphi 0, %s46
      %s49 = sphi 0, %s47
      %s61 = sphi 0, %s63
      %s64 = sphi 0, %s61
      %s65 = sphi 0, %s64
      %s81 = sphi 0, %s65
      %s89 = sphi 0, %s91
      %s92 = sphi 0, %s89
      %s93 = sphi 0, %s92
      %s109 = sphi 0, %s93
      %s117 = sphi 0, %s119
      %s120 = sphi 0, %s117
      %s121 = sphi 0, %s120
      %s137 = sphi 0, %s121
      %s141 = sphi 0, %s141
      %s143 = sphi 0, %s141
      %s144 = sphi 0, %s143
      %s158 = sphi 0, %s144
      %s162 = sphi 0, %s162
      %s164 = sphi 0, %s162
      %s165 = sphi 0, %s164
      %s179 = sphi 0, %s165
      %s183 = sphi 0, %s183
      %s185 = sphi 0, %s183
      %s186 = sphi 0, %s185
      %s200 = sphi 0, %s186
      %s204 = sphi 0, %s204
      %s206 = sphi 0, %s204
      %s207 = sphi 0, %s206
      %s221 = sphi 0, %s207
      %s225 = sphi 0, %s225
      %s227 = sphi 0, %s225
      %s228 = sphi 0, %s227
      %s242 = sphi 0, %s228
      %s246 = sphi 0, %s246
      %s248 = sphi 0, %s246
      %s249 = sphi 0, %s248
      %s263 = sphi 0, %s249
      %s267 = sphi 0, %s267
      %s269 = sphi 0, %s267
      %s270 = sphi 0, %s269
      %s284 = sphi 0, %s270
      %s292 = sphi 0, %s294
      %s295 = sphi 0, %s292
      %s296 = sphi 0, %s295
      %s312 = sphi 0, %s296
      %s320 = sphi 0, %s322
      %s323 = sphi 0, %s320
      %s324 = sphi 0, %s323
      %s340 = sphi 0, %s324
      %s348 = sphi 0, %s350
      %s351 = sphi 0, %s348
      %s352 = sphi 0, %s351
      %s368 = sphi 0, %s352
      %s376 = sphi 0, %s378
      %s379 = sphi 0, %s376
      %s380 = sphi 0, %s379
      %s396 = sphi 0, %s380
    $region4: #{tpu_custom_call.1} parent=1 // loop_header_branch
      %40 = sbr.rel (%p38) target = $region8
    $region5: #{tpu_custom_call.1} parent=1 // loop_body
      %s42 = ssub.s32 %s37, 1
      %s43 = ssub.s32 %s37, 2
      %s50 = sadd.s32 1, %s45
      %p51 = scmp.ge.s32.totalorder %s50, 1
      %s52 = scalar_select %p51, 0, %s50
      %s53 = sadd.s32 1, %s44
      %s54 = scalar_select %p51, %s53, %s44
      %p55 = scmp.ge.s32.totalorder %s54, 2
      %s56 = scalar_select %p55, 0, %s54
      %s57 = ssub.s32 %s44, %s56
      %s58 = ssub.s32 %s45, %s52
      %s59 = sor.u32 %s57, %s58
      %p60 = scmp.eq.s32.totalorder %s59, 0
      %s62 = sadd.s32 %s61, 1
      %s63 = scalar_select %p60, %s61, %s62
      %p66 = pneg %p60
      %p67 = scmp.eq.s32.totalorder %s37, 1
      %p68 = por %p66, %p67
      %p69 = scmp.ne.s32.totalorder %s61, %s64
      %p70 = scmp.eq.s32.totalorder %s37, 0
      %p71 = por %p69, %p70
      %p72 = scmp.ne.s32.totalorder %s61, %s64
      %p73 = scmp.eq.s32.totalorder %s42, 1
      %p74 = por %p72, %p73
      %p75 = scmp.ne.s32.totalorder %s64, %s65
      %p76 = scmp.eq.s32.totalorder %s42, 0
      %p77 = por %p75, %p76
      %p78 = scmp.ne.s32.totalorder %s64, %s65
      %p79 = scmp.eq.s32.totalorder %s43, 1
      %p80 = por %p78, %p79
      %p82 = scmp.ne.s32.totalorder %s65, %s81
      %p83 = scmp.eq.s32.totalorder %s43, 0
      %p84 = por %p82, %p83
      %s85 = ssub.s32 %s44, %s56
      %s86 = ssub.s32 %s45, %s52
      %s87 = sor.u32 %s85, %s86
      %p88 = scmp.eq.s32.totalorder %s87, 0
      %s90 = sadd.s32 %s89, 1
      %s91 = scalar_select %p88, %s89, %s90
      %p94 = pneg %p88
      %p95 = scmp.eq.s32.totalorder %s37, 1
      %p96 = por %p94, %p95
      %p97 = scmp.ne.s32.totalorder %s89, %s92
      %p98 = scmp.eq.s32.totalorder %s37, 0
      %p99 = por %p97, %p98
      %p100 = scmp.ne.s32.totalorder %s89, %s92
      %p101 = scmp.eq.s32.totalorder %s42, 1
      %p102 = por %p100, %p101
      %p103 = scmp.ne.s32.totalorder %s92, %s93
      %p104 = scmp.eq.s32.totalorder %s42, 0
      %p105 = por %p103, %p104
      %p106 = scmp.ne.s32.totalorder %s92, %s93
      %p107 = scmp.eq.s32.totalorder %s43, 1
      %p108 = por %p106, %p107
      %p110 = scmp.ne.s32.totalorder %s93, %s109
      %p111 = scmp.eq.s32.totalorder %s43, 0
      %p112 = por %p110, %p111
      %s113 = ssub.s32 %s44, %s56
      %s114 = ssub.s32 %s45, %s52
      %s115 = sor.u32 %s113, %s114
      %p116 = scmp.eq.s32.totalorder %s115, 0
      %s118 = sadd.s32 %s117, 1
      %s119 = scalar_select %p116, %s117, %s118
      %p122 = pneg %p116
      %p123 = scmp.eq.s32.totalorder %s37, 1
      %p124 = por %p122, %p123
      %p125 = scmp.ne.s32.totalorder %s117, %s120
      %p126 = scmp.eq.s32.totalorder %s37, 0
      %p127 = por %p125, %p126
      %p128 = scmp.ne.s32.totalorder %s117, %s120
      %p129 = scmp.eq.s32.totalorder %s42, 1
      %p130 = por %p128, %p129
      %p131 = scmp.ne.s32.totalorder %s120, %s121
      %p132 = scmp.eq.s32.totalorder %s42, 0
      %p133 = por %p131, %p132
      %p134 = scmp.ne.s32.totalorder %s120, %s121
      %p135 = scmp.eq.s32.totalorder %s43, 1
      %p136 = por %p134, %p135
      %p138 = scmp.ne.s32.totalorder %s121, %s137
      %p139 = scmp.eq.s32.totalorder %s43, 0
      %p140 = por %p138, %p139
      %s142 = sadd.s32 %s141, 1
      %p145 = scmp.eq.s32.totalorder %s37, 1
      %p146 = scmp.ne.s32.totalorder %s141, %s143
      %p147 = scmp.eq.s32.totalorder %s37, 0
      %p148 = por %p146, %p147
      %p149 = scmp.ne.s32.totalorder %s141, %s143
      %p150 = scmp.eq.s32.totalorder %s42, 1
      %p151 = por %p149, %p150
      %p152 = scmp.ne.s32.totalorder %s143, %s144
      %p153 = scmp.eq.s32.totalorder %s42, 0
      %p154 = por %p152, %p153
      %p155 = scmp.ne.s32.totalorder %s143, %s144
      %p156 = scmp.eq.s32.totalorder %s43, 1
      %p157 = por %p155, %p156
      %p159 = scmp.ne.s32.totalorder %s144, %s158
      %p160 = scmp.eq.s32.totalorder %s43, 0
      %p161 = por %p159, %p160
      %s163 = sadd.s32 %s162, 1
      %p166 = scmp.eq.s32.totalorder %s37, 1
      %p167 = scmp.ne.s32.totalorder %s162, %s164
      %p168 = scmp.eq.s32.totalorder %s37, 0
      %p169 = por %p167, %p168
      %p170 = scmp.ne.s32.totalorder %s162, %s164
      %p171 = scmp.eq.s32.totalorder %s42, 1
      %p172 = por %p170, %p171
      %p173 = scmp.ne.s32.totalorder %s164, %s165
      %p174 = scmp.eq.s32.totalorder %s42, 0
      %p175 = por %p173, %p174
      %p176 = scmp.ne.s32.totalorder %s164, %s165
      %p177 = scmp.eq.s32.totalorder %s43, 1
      %p178 = por %p176, %p177
      %p180 = scmp.ne.s32.totalorder %s165, %s179
      %p181 = scmp.eq.s32.totalorder %s43, 0
      %p182 = por %p180, %p181
      %s184 = sadd.s32 %s183, 1
      %p187 = scmp.eq.s32.totalorder %s37, 1
      %p188 = scmp.ne.s32.totalorder %s183, %s185
      %p189 = scmp.eq.s32.totalorder %s37, 0
      %p190 = por %p188, %p189
      %p191 = scmp.ne.s32.totalorder %s183, %s185
      %p192 = scmp.eq.s32.totalorder %s42, 1
      %p193 = por %p191, %p192
      %p194 = scmp.ne.s32.totalorder %s185, %s186
      %p195 = scmp.eq.s32.totalorder %s42, 0
      %p196 = por %p194, %p195
      %p197 = scmp.ne.s32.totalorder %s185, %s186
      %p198 = scmp.eq.s32.totalorder %s43, 1
      %p199 = por %p197, %p198
      %p201 = scmp.ne.s32.totalorder %s186, %s200
      %p202 = scmp.eq.s32.totalorder %s43, 0
      %p203 = por %p201, %p202
      %s205 = sadd.s32 %s204, 1
      %p208 = scmp.eq.s32.totalorder %s37, 1
      %p209 = scmp.ne.s32.totalorder %s204, %s206
      %p210 = scmp.eq.s32.totalorder %s37, 0
      %p211 = por %p209, %p210
      %p212 = scmp.ne.s32.totalorder %s204, %s206
      %p213 = scmp.eq.s32.totalorder %s42, 1
      %p214 = por %p212, %p213
      %p215 = scmp.ne.s32.totalorder %s206, %s207
      %p216 = scmp.eq.s32.totalorder %s42, 0
      %p217 = por %p215, %p216
      %p218 = scmp.ne.s32.totalorder %s206, %s207
      %p219 = scmp.eq.s32.totalorder %s43, 1
      %p220 = por %p218, %p219
      %p222 = scmp.ne.s32.totalorder %s207, %s221
      %p223 = scmp.eq.s32.totalorder %s43, 0
      %p224 = por %p222, %p223
      %s226 = sadd.s32 %s225, 1
      %p229 = scmp.eq.s32.totalorder %s37, 1
      %p230 = scmp.ne.s32.totalorder %s225, %s227
      %p231 = scmp.eq.s32.totalorder %s37, 0
      %p232 = por %p230, %p231
      %p233 = scmp.ne.s32.totalorder %s225, %s227
      %p234 = scmp.eq.s32.totalorder %s42, 1
      %p235 = por %p233, %p234
      %p236 = scmp.ne.s32.totalorder %s227, %s228
      %p237 = scmp.eq.s32.totalorder %s42, 0
      %p238 = por %p236, %p237
      %p239 = scmp.ne.s32.totalorder %s227, %s228
      %p240 = scmp.eq.s32.totalorder %s43, 1
      %p241 = por %p239, %p240
      %p243 = scmp.ne.s32.totalorder %s228, %s242
      %p244 = scmp.eq.s32.totalorder %s43, 0
      %p245 = por %p243, %p244
      %s247 = sadd.s32 %s246, 1
      %p250 = scmp.eq.s32.totalorder %s37, 1
      %p251 = scmp.ne.s32.totalorder %s246, %s248
      %p252 = scmp.eq.s32.totalorder %s37, 0
      %p253 = por %p251, %p252
      %p254 = scmp.ne.s32.totalorder %s246, %s248
      %p255 = scmp.eq.s32.totalorder %s42, 1
      %p256 = por %p254, %p255
      %p257 = scmp.ne.s32.totalorder %s248, %s249
      %p258 = scmp.eq.s32.totalorder %s42, 0
      %p259 = por %p257, %p258
      %p260 = scmp.ne.s32.totalorder %s248, %s249
      %p261 = scmp.eq.s32.totalorder %s43, 1
      %p262 = por %p260, %p261
      %p264 = scmp.ne.s32.totalorder %s249, %s263
      %p265 = scmp.eq.s32.totalorder %s43, 0
      %p266 = por %p264, %p265
      %s268 = sadd.s32 %s267, 1
      %p271 = scmp.eq.s32.totalorder %s37, 1
      %p272 = scmp.ne.s32.totalorder %s267, %s269
      %p273 = scmp.eq.s32.totalorder %s37, 0
      %p274 = por %p272, %p273
      %p275 = scmp.ne.s32.totalorder %s267, %s269
      %p276 = scmp.eq.s32.totalorder %s42, 1
      %p277 = por %p275, %p276
      %p278 = scmp.ne.s32.totalorder %s269, %s270
      %p279 = scmp.eq.s32.totalorder %s42, 0
      %p280 = por %p278, %p279
      %p281 = scmp.ne.s32.totalorder %s269, %s270
      %p282 = scmp.eq.s32.totalorder %s43, 1
      %p283 = por %p281, %p282
      %p285 = scmp.ne.s32.totalorder %s270, %s284
      %p286 = scmp.eq.s32.totalorder %s43, 0
      %p287 = por %p285, %p286
      %s288 = ssub.s32 %s44, %s56
      %s289 = ssub.s32 %s45, %s52
      %s290 = sor.u32 %s288, %s289
      %p291 = scmp.eq.s32.totalorder %s290, 0
      %s293 = sadd.s32 %s292, 1
      %s294 = scalar_select %p291, %s292, %s293
      %p297 = pneg %p291
      %p298 = scmp.eq.s32.totalorder %s37, 1
      %p299 = por %p297, %p298
      %p300 = scmp.ne.s32.totalorder %s292, %s295
      %p301 = scmp.eq.s32.totalorder %s37, 0
      %p302 = por %p300, %p301
      %p303 = scmp.ne.s32.totalorder %s292, %s295
      %p304 = scmp.eq.s32.totalorder %s42, 1
      %p305 = por %p303, %p304
      %p306 = scmp.ne.s32.totalorder %s295, %s296
      %p307 = scmp.eq.s32.totalorder %s42, 0
      %p308 = por %p306, %p307
      %p309 = scmp.ne.s32.totalorder %s295, %s296
      %p310 = scmp.eq.s32.totalorder %s43, 1
      %p311 = por %p309, %p310
      %p313 = scmp.ne.s32.totalorder %s296, %s312
      %p314 = scmp.eq.s32.totalorder %s43, 0
      %p315 = por %p313, %p314
      %s316 = ssub.s32 %s44, %s56
      %s317 = ssub.s32 %s45, %s52
      %s318 = sor.u32 %s316, %s317
      %p319 = scmp.eq.s32.totalorder %s318, 0
      %s321 = sadd.s32 %s320, 1
      %s322 = scalar_select %p319, %s320, %s321
      %p325 = pneg %p319
      %p326 = scmp.eq.s32.totalorder %s37, 1
      %p327 = por %p325, %p326
      %p328 = scmp.ne.s32.totalorder %s320, %s323
      %p329 = scmp.eq.s32.totalorder %s37, 0
      %p330 = por %p328, %p329
      %p331 = scmp.ne.s32.totalorder %s320, %s323
      %p332 = scmp.eq.s32.totalorder %s42, 1
      %p333 = por %p331, %p332
      %p334 = scmp.ne.s32.totalorder %s323, %s324
      %p335 = scmp.eq.s32.totalorder %s42, 0
      %p336 = por %p334, %p335
      %p337 = scmp.ne.s32.totalorder %s323, %s324
      %p338 = scmp.eq.s32.totalorder %s43, 1
      %p339 = por %p337, %p338
      %p341 = scmp.ne.s32.totalorder %s324, %s340
      %p342 = scmp.eq.s32.totalorder %s43, 0
      %p343 = por %p341, %p342
      %s344 = ssub.s32 %s44, %s56
      %s345 = ssub.s32 %s45, %s52
      %s346 = sor.u32 %s344, %s345
      %p347 = scmp.eq.s32.totalorder %s346, 0
      %s349 = sadd.s32 %s348, 1
      %s350 = scalar_select %p347, %s348, %s349
      %p353 = pneg %p347
      %p354 = scmp.eq.s32.totalorder %s37, 1
      %p355 = por %p353, %p354
      %p356 = scmp.ne.s32.totalorder %s348, %s351
      %p357 = scmp.eq.s32.totalorder %s37, 0
      %p358 = por %p356, %p357
      %p359 = scmp.ne.s32.totalorder %s348, %s351
      %p360 = scmp.eq.s32.totalorder %s42, 1
      %p361 = por %p359, %p360
      %p362 = scmp.ne.s32.totalorder %s351, %s352
      %p363 = scmp.eq.s32.totalorder %s42, 0
      %p364 = por %p362, %p363
      %p365 = scmp.ne.s32.totalorder %s351, %s352
      %p366 = scmp.eq.s32.totalorder %s43, 1
      %p367 = por %p365, %p366
      %p369 = scmp.ne.s32.totalorder %s352, %s368
      %p370 = scmp.eq.s32.totalorder %s43, 0
      %p371 = por %p369, %p370
      %s372 = ssub.s32 %s44, %s56
      %s373 = ssub.s32 %s45, %s52
      %s374 = sor.u32 %s372, %s373
      %p375 = scmp.eq.s32.totalorder %s374, 0
      %s377 = sadd.s32 %s376, 1
      %s378 = scalar_select %p375, %s376, %s377
      %p381 = pneg %p375
      %p382 = scmp.eq.s32.totalorder %s37, 1
      %p383 = por %p381, %p382
      %p384 = scmp.ne.s32.totalorder %s376, %s379
      %p385 = scmp.eq.s32.totalorder %s37, 0
      %p386 = por %p384, %p385
      %p387 = scmp.ne.s32.totalorder %s376, %s379
      %p388 = scmp.eq.s32.totalorder %s42, 1
      %p389 = por %p387, %p388
      %p390 = scmp.ne.s32.totalorder %s379, %s380
      %p391 = scmp.eq.s32.totalorder %s42, 0
      %p392 = por %p390, %p391
      %p393 = scmp.ne.s32.totalorder %s379, %s380
      %p394 = scmp.eq.s32.totalorder %s43, 1
      %p395 = por %p393, %p394
      %p397 = scmp.ne.s32.totalorder %s380, %s396
      %p398 = scmp.eq.s32.totalorder %s43, 0
      %p399 = por %p397, %p398
      %p400 = scmp.le.s32.totalorder 1, %s37
      %p401 = scmp.lt.s32.totalorder %s37, 3
      %p402 = pnand %p400, %p401
      %p403 = pneg %p402
      // Predicated region
      $region9: #{tpu_custom_call.1} parent=5 // pred_check
        _
      $region10: #{tpu_custom_call.1} parent=5 // pred_check_branch
        %405 = sbr.rel (%p402) target = $region12
      $region11: #{tpu_custom_call.1} parent=5 // pred_region
        %s406 = ssub.s32 %s37, 1
        // Predicated region
        $region13: #{tpu_custom_call.1} parent=11 // pred_check
          %p407 = pneg %p154
        $region14: #{tpu_custom_call.1} parent=11 // pred_check_branch
          %409 = sbr.rel (%p407) target = $region16
        $region15: #{tpu_custom_call.1} parent=11 // pred_region
          %s411 = ssub.s32 512, 512
          %412 = vsyncadd [#allocation9], %s411
          %s413 = sshll.u32 [#allocation8], 4
          %s414 = int_to_ptr.vmem [resolvable:$true] %s413
          %419 = dma.hbm_to_vmem [thread:$0]  %s3, 512, %s414, [#allocation9], 128, 128, 8
        $region16: #{tpu_custom_call.1} parent=11 // pred_fallthru
          _
        // Predicated region
        $region17: #{tpu_custom_call.1} parent=11 // pred_check
          %p420 = pneg %p175
        $region18: #{tpu_custom_call.1} parent=11 // pred_check_branch
          %422 = sbr.rel (%p420) target = $region20
        $region19: #{tpu_custom_call.1} parent=11 // pred_region
          %s424 = ssub.s32 256, 256
          %425 = vsyncadd [#allocation9], %s424
          %s426 = sshll.u32 [#allocation10], 4
          %s427 = int_to_ptr.vmem [resolvable:$true] %s426
          %432 = dma.hbm_to_vmem [thread:$0]  %s4, 256, %s427, [#allocation9], 64, 64, 4
        $region20: #{tpu_custom_call.1} parent=11 // pred_fallthru
          _
        // Predicated region
        $region21: #{tpu_custom_call.1} parent=11 // pred_check
          %p433 = pneg %p196
        $region22: #{tpu_custom_call.1} parent=11 // pred_check_branch
          %435 = sbr.rel (%p433) target = $region24
        $region23: #{tpu_custom_call.1} parent=11 // pred_region
          %s437 = ssub.s32 256, 256
          %438 = vsyncadd [#allocation12], %s437
          %s439 = sshll.u32 [#allocation11], 4
          %s440 = int_to_ptr.vmem [resolvable:$true] %s439
          %445 = dma.hbm_to_vmem [thread:$0]  %s5, 256, %s440, [#allocation12], 64, 64, 4
        $region24: #{tpu_custom_call.1} parent=11 // pred_fallthru
          _
        // Predicated region
        $region25: #{tpu_custom_call.1} parent=11 // pred_check
          %p446 = pneg %p217
        $region26: #{tpu_custom_call.1} parent=11 // pred_check_branch
          %448 = sbr.rel (%p446) target = $region28
        $region27: #{tpu_custom_call.1} parent=11 // pred_region
          _
        $region28: #{tpu_custom_call.1} parent=11 // pred_fallthru
          _
        // Predicated region
        $region29: #{tpu_custom_call.1} parent=11 // pred_check
          %p449 = pneg %p238
        $region30: #{tpu_custom_call.1} parent=11 // pred_check_branch
          %451 = sbr.rel (%p449) target = $region32
        $region31: #{tpu_custom_call.1} parent=11 // pred_region
          _
        $region32: #{tpu_custom_call.1} parent=11 // pred_fallthru
          _
        // Predicated region
        $region33: #{tpu_custom_call.1} parent=11 // pred_check
          %p452 = pneg %p259
        $region34: #{tpu_custom_call.1} parent=11 // pred_check_branch
          %454 = sbr.rel (%p452) target = $region36
        $region35: #{tpu_custom_call.1} parent=11 // pred_region
          _
        $region36: #{tpu_custom_call.1} parent=11 // pred_fallthru
          _
        // Predicated region
        $region37: #{tpu_custom_call.1} parent=11 // pred_check
          %p455 = pneg %p280
        $region38: #{tpu_custom_call.1} parent=11 // pred_check_branch
          %457 = sbr.rel (%p455) target = $region40
        $region39: #{tpu_custom_call.1} parent=11 // pred_region
          _
        $region40: #{tpu_custom_call.1} parent=11 // pred_fallthru
          _
      $region12: #{tpu_custom_call.1} parent=5 // pred_fallthru
        _
      %p458 = scmp.lt.s32.totalorder %s37, 2
      // Predicated region
      $region41: #{tpu_custom_call.1} parent=5 // pred_check
        %p459 = pneg %p458
      $region42: #{tpu_custom_call.1} parent=5 // pred_check_branch
        %461 = sbr.rel (%p459) target = $region44
      $region43: #{tpu_custom_call.1} parent=5 // pred_region
        // Predicated region
        $region45: #{tpu_custom_call.1} parent=43 // pred_check
          %p462 = pneg %p71
        $region46: #{tpu_custom_call.1} parent=43 // pred_check_branch
          %464 = sbr.rel (%p462) target = $region48
        $region47: #{tpu_custom_call.1} parent=43 // pred_region
          %s465 = sand.u32 %s61, 1
          %s466 = scalar_lea.sflag [#allocation3], %s465
          %s467 = sand.u32 %s61, 1
          %s468 = smul.addr %s467, 8
          %s469 = scalar_lea.vmem [#allocation2], %s468
          %s471 = ssub.s32 128, 128
          %472 = vsyncadd %s466, %s471
          %s473 = sadd.s32 %s45, %s44
          %s474 = smul.addr %s473, 128
          %s475 = scalar_lea.hbm %s0, %s474
          %s477 = sshll.u32 %s469, 4
          %s478 = int_to_ptr.vmem [resolvable:$true] %s477
          %480 = dma.hbm_to_vmem [thread:$0]  %s475, 128, %s478, %s466
        $region48: #{tpu_custom_call.1} parent=43 // pred_fallthru
          _
        // Predicated region
        $region49: #{tpu_custom_call.1} parent=43 // pred_check
          %p481 = pneg %p99
        $region50: #{tpu_custom_call.1} parent=43 // pred_check_branch
          %483 = sbr.rel (%p481) target = $region52
        $region51: #{tpu_custom_call.1} parent=43 // pred_region
          %s484 = sand.u32 %s37, 1
          %s485 = scalar_lea.sflag [#allocation6], %s484
          %s486 = sand.u32 %s89, 1
          %s487 = smul.addr %s486, 8
          %s488 = scalar_lea.vmem [#allocation5], %s487
          %s490 = ssub.s32 128, 128
          %491 = vsyncadd %s485, %s490
          %s492 = sadd.s32 %s45, %s44
          %s493 = smul.addr %s492, 128
          %s494 = scalar_lea.hbm %s1, %s493
          %s496 = sshll.u32 %s488, 4
          %s497 = int_to_ptr.vmem [resolvable:$true] %s496
          %499 = dma.hbm_to_vmem [thread:$0]  %s494, 128, %s497, %s485
        $region52: #{tpu_custom_call.1} parent=43 // pred_fallthru
          _
        // Predicated region
        $region53: #{tpu_custom_call.1} parent=43 // pred_check
          %p500 = pneg %p127
        $region54: #{tpu_custom_call.1} parent=43 // pred_check_branch
          %502 = sbr.rel (%p500) target = $region56
        $region55: #{tpu_custom_call.1} parent=43 // pred_region
          %s503 = sand.u32 %s37, 1
          %s504 = scalar_lea.sflag [#allocation6], %s503
          %s505 = sand.u32 %s117, 1
          %s506 = smul.addr %s505, 8
          %s507 = scalar_lea.vmem [#allocation7], %s506
          %s509 = ssub.s32 128, 128
          %510 = vsyncadd %s504, %s509
          %s511 = sadd.s32 %s45, %s44
          %s512 = smul.addr %s511, 128
          %s513 = scalar_lea.hbm %s2, %s512
          %s515 = sshll.u32 %s507, 4
          %s516 = int_to_ptr.vmem [resolvable:$true] %s515
          %518 = dma.hbm_to_vmem [thread:$0]  %s513, 128, %s516, %s504
        $region56: #{tpu_custom_call.1} parent=43 // pred_fallthru
          _
      $region44: #{tpu_custom_call.1} parent=5 // pred_fallthru
        _
      %p519 = scmp.le.s32.totalorder 1, %s37
      %p520 = scmp.lt.s32.totalorder %s37, 3
      %p521 = pnand %p519, %p520
      %p522 = pneg %p521
      // Predicated region
      $region57: #{tpu_custom_call.1} parent=5 // pred_check
        _
      $region58: #{tpu_custom_call.1} parent=5 // pred_check_branch
        %524 = sbr.rel (%p521) target = $region60
      $region59: #{tpu_custom_call.1} parent=5 // pred_region
        %s525 = ssub.s32 %s37, 1
        %s526 = sand.u32 %s64, 1
        %s527 = scalar_lea.sflag [#allocation3], %s526
        %s528 = sand.u32 %s64, 1
        %s529 = smul.addr %s528, 8
        %s530 = scalar_lea.vmem [#allocation2], %s529
        // Predicated region
        $region61: #{tpu_custom_call.1} parent=59 // pred_check
          %p531 = pneg %p77
        $region62: #{tpu_custom_call.1} parent=59 // pred_check_branch
          %533 = sbr.rel (%p531) target = $region64
        $region63: #{tpu_custom_call.1} parent=59 // pred_region
          %534 = dma.done %s527, 128
        $region64: #{tpu_custom_call.1} parent=59 // pred_fallthru
          _
        %s535 = sand.u32 %s42, 1
        %s536 = scalar_lea.sflag [#allocation6], %s535
        %s537 = sand.u32 %s92, 1
        %s538 = smul.addr %s537, 8
        %s539 = scalar_lea.vmem [#allocation5], %s538
        // Predicated region
        $region65: #{tpu_custom_call.1} parent=59 // pred_check
          %p540 = pneg %p105
        $region66: #{tpu_custom_call.1} parent=59 // pred_check_branch
          %542 = sbr.rel (%p540) target = $region68
        $region67: #{tpu_custom_call.1} parent=59 // pred_region
          %543 = dma.done %s536, 128
        $region68: #{tpu_custom_call.1} parent=59 // pred_fallthru
          _
        %s544 = sand.u32 %s42, 1
        %s545 = scalar_lea.sflag [#allocation6], %s544
        %s546 = sand.u32 %s120, 1
        %s547 = smul.addr %s546, 8
        %s548 = scalar_lea.vmem [#allocation7], %s547
        // Predicated region
        $region69: #{tpu_custom_call.1} parent=59 // pred_check
          %p549 = pneg %p133
        $region70: #{tpu_custom_call.1} parent=59 // pred_check_branch
          %551 = sbr.rel (%p549) target = $region72
        $region71: #{tpu_custom_call.1} parent=59 // pred_region
          %552 = dma.done %s545, 128
        $region72: #{tpu_custom_call.1} parent=59 // pred_fallthru
          _
        // Predicated region
        $region73: #{tpu_custom_call.1} parent=59 // pred_check
          %p553 = pneg %p154
        $region74: #{tpu_custom_call.1} parent=59 // pred_check_branch
          %555 = sbr.rel (%p553) target = $region76
        $region75: #{tpu_custom_call.1} parent=59 // pred_region
          %556 = dma.done [#allocation9], 512
        $region76: #{tpu_custom_call.1} parent=59 // pred_fallthru
          _
        // Predicated region
        $region77: #{tpu_custom_call.1} parent=59 // pred_check
          %p557 = pneg %p175
        $region78: #{tpu_custom_call.1} parent=59 // pred_check_branch
          %559 = sbr.rel (%p557) target = $region80
        $region79: #{tpu_custom_call.1} parent=59 // pred_region
          %560 = dma.done [#allocation9], 256
        $region80: #{tpu_custom_call.1} parent=59 // pred_fallthru
          _
        // Predicated region
        $region81: #{tpu_custom_call.1} parent=59 // pred_check
          %p561 = pneg %p196
        $region82: #{tpu_custom_call.1} parent=59 // pred_check_branch
          %563 = sbr.rel (%p561) target = $region84
        $region83: #{tpu_custom_call.1} parent=59 // pred_region
          %564 = dma.done [#allocation12], 256
        $region84: #{tpu_custom_call.1} parent=59 // pred_fallthru
          _
        %s565 = sand.u32 %s64, 1
        %s566 = scalar_lea.sflag [#allocation3], %s565
        %s567 = sand.u32 %s64, 1
        %s568 = smul.addr %s567, 8
        %s569 = scalar_lea.vmem [#allocation2], %s568
        %p570 = pneg %p77
        %p571 = pneg %p74
        %s572 = sand.u32 %s42, 1
        %s573 = scalar_lea.sflag [#allocation6], %s572
        %s574 = sand.u32 %s92, 1
        %s575 = smul.addr %s574, 8
        %s576 = scalar_lea.vmem [#allocation5], %s575
        %p577 = pneg %p105
        %p578 = pneg %p102
        %s579 = sand.u32 %s42, 1
        %s580 = scalar_lea.sflag [#allocation6], %s579
        %s581 = sand.u32 %s120, 1
        %s582 = smul.addr %s581, 8
        %s583 = scalar_lea.vmem [#allocation7], %s582
        %p584 = pneg %p133
        %p585 = pneg %p130
        %p586 = pneg %p154
        %p587 = pneg %p151
        %p588 = pneg %p175
        %p589 = pneg %p172
        %p590 = pneg %p196
        %p591 = pneg %p193
        %p592 = pneg %p217
        %p593 = pneg %p214
        %p594 = pneg %p238
        %p595 = pneg %p235
        %p596 = pneg %p259
        %p597 = pneg %p256
        %p598 = pneg %p280
        %p599 = pneg %p277
        %p600 = pneg %p308
        %p601 = pneg %p305
        %s602 = sand.u32 %s295, 1
        %s603 = scalar_lea.sflag [#allocation4], %s602
        %s604 = sand.u32 %s295, 1
        %s605 = smul.addr %s604, 4
        %s606 = scalar_lea.vmem [#allocation13], %s605
        %p607 = pneg %p336
        %p608 = pneg %p333
        %s609 = sand.u32 %s42, 1
        %s610 = scalar_lea.sflag [#allocation15], %s609
        %s611 = sand.u32 %s323, 1
        %s612 = smul.addr %s611, 4
        %s613 = scalar_lea.vmem [#allocation14], %s612
        %p614 = pneg %p364
        %p615 = pneg %p361
        %s616 = sand.u32 %s42, 1
        %s617 = scalar_lea.sflag [#allocation15], %s616
        %s618 = sand.u32 %s351, 1
        %s619 = smul.addr %s618, 4
        %s620 = scalar_lea.vmem [#allocation16], %s619
        %p621 = pneg %p392
        %p622 = pneg %p389
        %s623 = sand.u32 %s379, 1
        %s624 = scalar_lea.sflag [#allocation18], %s623
        %s625 = sand.u32 %s379, 1
        %s626 = smul.addr %s625, 4
        %s627 = scalar_lea.vmem [#allocation17], %s626
        %v629 = vld [vmem:[%s530] sm:$0xff]
        %v630 = vld [vmem:[#allocation8] sm:$0xff]
        %v631 = vld [vmem:[#allocation8 + $0x8] sm:$0xff]
        %v632 = vld [vmem:[#allocation8 + $0x10] sm:$0xff]
        %v633 = vld [vmem:[#allocation8 + $0x18] sm:$0xff]
        %v634 = vld [vmem:[%s6] sm:$0x1]
        %v636 = vlaneseq
        %v637 = vshrl.u32 %v636, 7
        %v638 = vsub.s32 0, %v637
        %v639 = vrot.slane %v634, %v638
        %vm641 = vcmask 261120
        %v643 = vsel %vm641, %v629, 0
        %645 = vmatprep.subr.mxu0 0.0
        %646 = vmatpush1.msra.mxu0 0.0
        %647 = vmatprep.subr.mxu0 0.0
        %648 = vmatpush1.msra.mxu0 0.0
        %649 = vmatprep.subr.mxu0 0.0
        %650 = vmatpush1.msra.mxu0 0.0
        %651 = vmatprep.subr.mxu0 0.0
        %652 = vmatpush1.msra.mxu0 0.0
        %653 = vmatprep.subr.mxu0 0.0
        %654 = vmatpush1.msra.mxu0 0.0
        %655 = vmatprep.subr.mxu0 0.0
        %656 = vmatpush1.msra.mxu0 0.0
        %657 = vmatprep.subr.mxu0 0.0
        %658 = vmatpush1.msra.mxu0 0.0
        %659 = vmatprep.subr.mxu0 0.0
        %660 = vmatpush1.msra.mxu0 0.0
        %661 = vmatprep.subr.mxu0 0.0
        %662 = vmatpush1.msra.mxu0 0.0
        %663 = vmatprep.subr.mxu0 0.0
        %664 = vmatpush1.msra.mxu0 0.0
        %665 = vmatprep.subr.mxu0 0.0
        %666 = vmatpush1.msra.mxu0 0.0
        %667 = vmatprep.subr.mxu0 0.0
        %668 = vmatpush1.msra.mxu0 0.0
        %669 = vmatprep.subr.mxu0 0.0
        %670 = vmatpush1.msra.mxu0 %v633
        %671 = vmatprep.subr.mxu0 0.0
        %672 = vmatpush1.msra.mxu0 %v632
        %673 = vmatprep.subr.mxu0 0.0
        %674 = vmatpush1.msra.mxu0 %v631
        %675 = vmatprep.subr.mxu0 0.0
        %676 = vmatpush1.msra.mxu0 %v630
        %677 = vmatprep.subr.mxu0 0.0
        %678 = vmatpush2.msra.mxu0 0.0
        %679 = vmatprep.subr.mxu0 0.0
        %680 = vmatpush2.msra.mxu0 0.0
        %681 = vmatprep.subr.mxu0 0.0
        %682 = vmatpush2.msra.mxu0 0.0
        %683 = vmatprep.subr.mxu0 0.0
        %684 = vmatpush2.msra.mxu0 0.0
        %685 = vmatprep.subr.mxu0 0.0
        %686 = vmatpush2.msra.mxu0 0.0
        %687 = vmatprep.subr.mxu0 0.0
        %688 = vmatpush2.msra.mxu0 0.0
        %689 = vmatprep.subr.mxu0 0.0
        %690 = vmatpush2.msra.mxu0 0.0
        %691 = vmatprep.subr.mxu0 0.0
        %692 = vmatpush2.msra.mxu0 0.0
        %693 = vmatprep.subr.mxu0 0.0
        %694 = vmatpush2.msra.mxu0 0.0
        %695 = vmatprep.subr.mxu0 0.0
        %696 = vmatpush2.msra.mxu0 0.0
        %697 = vmatprep.subr.mxu0 0.0
        %698 = vmatpush2.msra.mxu0 0.0
        %699 = vmatprep.subr.mxu0 0.0
        %700 = vmatpush2.msra.mxu0 0.0
        %701 = vmatprep.subr.mxu0 0.0
        %702 = vmatpush2.msra.mxu0 0.0
        %703 = vmatprep.subr.mxu0 0.0
        %704 = vmatpush2.msra.mxu0 0.0
        %705 = vmatprep.subr.mxu0 0.0
        %706 = vmatpush2.msra.mxu0 0.0
        %707 = vmatprep.subr.mxu0 0.0
        %708 = vmatpush2.msra.mxu0 0.0
        %709 = vmatprep.mubr.f32.mxu0 0.0
        %710 = vmatmul.mubr.f32.gmra.mxu0 %v643
        %v711 = vpop.f32.mrf.mxu0
        %v712 = vadd.f32 %v639, %v711
        %v713 = vpop.f32.mrf.mxu0
        %714 = vdwg.mxu0
        %v715 = vld [vmem:[%s9] sm:$0xf]
        %v716 = vmul.f32 %v712, %v712
        %v718 = vsel %vm641, %v715, 0
        %v721 = vsel %vm641, %v716, 0
        %723 = vmatprep.subr.mxu0 0.0
        %724 = vmatpush1.xpose.msra.mxu0 0.0
        %725 = vmatprep.subr.mxu0 0.0
        %726 = vmatpush1.xpose.msra.mxu0 0.0
        %727 = vmatprep.subr.mxu0 0.0
        %728 = vmatpush1.xpose.msra.mxu0 0.0
        %729 = vmatprep.subr.mxu0 0.0
        %730 = vmatpush1.xpose.msra.mxu0 0.0
        %731 = vmatprep.subr.mxu0 0.0
        %732 = vmatpush1.xpose.msra.mxu0 0.0
        %733 = vmatprep.subr.mxu0 0.0
        %734 = vmatpush1.xpose.msra.mxu0 0.0
        %735 = vmatprep.subr.mxu0 0.0
        %736 = vmatpush1.xpose.msra.mxu0 0.0
        %737 = vmatprep.subr.mxu0 0.0
        %738 = vmatpush1.xpose.msra.mxu0 0.0
        %739 = vmatprep.subr.mxu0 0.0
        %740 = vmatpush1.xpose.msra.mxu0 0.0
        %741 = vmatprep.subr.mxu0 0.0
        %742 = vmatpush1.xpose.msra.mxu0 0.0
        %743 = vmatprep.subr.mxu0 0.0
        %744 = vmatpush1.xpose.msra.mxu0 0.0
        %745 = vmatprep.subr.mxu0 0.0
        %746 = vmatpush1.xpose.msra.mxu0 0.0
        %747 = vmatprep.subr.mxu0 0.0
        %748 = vmatpush1.xpose.msra.mxu0 0.0
        %749 = vmatprep.subr.mxu0 0.0
        %750 = vmatpush1.xpose.msra.mxu0 0.0
        %751 = vmatprep.subr.mxu0 0.0
        %752 = vmatpush1.xpose.msra.mxu0 0.0
        %753 = vmatprep.subr.mxu0 0.0
        %754 = vmatpush1.xpose.msra.mxu0 %v721
        %755 = vmatprep.subr.mxu0 0.0
        %756 = vmatpush2.xpose.msra.mxu0 0.0
        %757 = vmatprep.subr.mxu0 0.0
        %758 = vmatpush2.xpose.msra.mxu0 0.0
        %759 = vmatprep.subr.mxu0 0.0
        %760 = vmatpush2.xpose.msra.mxu0 0.0
        %761 = vmatprep.subr.mxu0 0.0
        %762 = vmatpush2.xpose.msra.mxu0 0.0
        %763 = vmatprep.subr.mxu0 0.0
        %764 = vmatpush2.xpose.msra.mxu0 0.0
        %765 = vmatprep.subr.mxu0 0.0
        %766 = vmatpush2.xpose.msra.mxu0 0.0
        %767 = vmatprep.subr.mxu0 0.0
        %768 = vmatpush2.xpose.msra.mxu0 0.0
        %769 = vmatprep.subr.mxu0 0.0
        %770 = vmatpush2.xpose.msra.mxu0 0.0
        %771 = vmatprep.subr.mxu0 0.0
        %772 = vmatpush2.xpose.msra.mxu0 0.0
        %773 = vmatprep.subr.mxu0 0.0
        %774 = vmatpush2.xpose.msra.mxu0 0.0
        %775 = vmatprep.subr.mxu0 0.0
        %776 = vmatpush2.xpose.msra.mxu0 0.0
        %777 = vmatprep.subr.mxu0 0.0
        %778 = vmatpush2.xpose.msra.mxu0 0.0
        %779 = vmatprep.subr.mxu0 0.0
        %780 = vmatpush2.xpose.msra.mxu0 0.0
        %781 = vmatprep.subr.mxu0 0.0
        %782 = vmatpush2.xpose.msra.mxu0 0.0
        %783 = vmatprep.subr.mxu0 0.0
        %784 = vmatpush2.xpose.msra.mxu0 0.0
        %785 = vmatprep.subr.mxu0 0.0
        %786 = vmatpush2.xpose.msra.mxu0 0.0
        %787 = vmatprep.mubr.f32.mxu0 0.0
        %788 = vmatmul.mubr.f32.gmra.mxu0 %v718
        %v789 = vpop.f32.mrf.mxu0
        %v790 = vadd.f32 0.0, %v789
        %v791 = vpop.f32.mrf.mxu0
        %792 = vdwg.mxu0
        %vm793 = vcmask 60416
        %794 = vst.msk [vmem:[%s627] sm:$0xf] %vm793, %v790
        %v795 = vpack.c.bf16 %v712, %v712
        %vm796 = vcmask 257024
        %797 = vst.msk [vmem:[%s606] sm:$0xf] %vm796, %v795
        %v798 = vld [vmem:[%s539] sm:$0xff]
        %v799 = vpack.c.bf16 %v798, %v798
        %v800 = vld [vmem:[#allocation10] sm:$0xf]
        %v801 = vld [vmem:[#allocation10 + $0x4] sm:$0xf]
        %v802 = vld [vmem:[#allocation10 + $0x8] sm:$0xf]
        %v803 = vld [vmem:[#allocation10 + $0xc] sm:$0xf]
        %v804 = vld [vmem:[%s7] sm:$0x1]
        %v806 = vlaneseq
        %v807 = vshrl.u32 %v806, 7
        %v808 = vsub.s32 0, %v807
        %v809 = vrot.slane %v804, %v808
        %v815 = vunpack.c.l.b16 %v800
        %v816 = vunpack.c.l.b16 %v801
        %v817 = vunpack.c.l.b16 %v802
        %v818 = vunpack.c.l.b16 %v803
        %v819 = vpack.c.b16 %v816, %v815
        %v820 = vpack.c.b16 %v818, %v817
        %v824 = vsel %vm641, %v799, 0
        %826 = vmatprep.subr.bf16.mxu0 0
        %827 = vmatpush1.bf16.msra.mxu0 0
        %828 = vmatprep.subr.bf16.mxu0 0
        %829 = vmatpush1.bf16.msra.mxu0 0
        %830 = vmatprep.subr.bf16.mxu0 0
        %831 = vmatpush1.bf16.msra.mxu0 0
        %832 = vmatprep.subr.bf16.mxu0 0
        %833 = vmatpush1.bf16.msra.mxu0 0
        %834 = vmatprep.subr.bf16.mxu0 0
        %835 = vmatpush1.bf16.msra.mxu0 0
        %836 = vmatprep.subr.bf16.mxu0 0
        %837 = vmatpush1.bf16.msra.mxu0 0
        %838 = vmatprep.subr.bf16.mxu0 0
        %839 = vmatpush1.bf16.msra.mxu0 %v820
        %840 = vmatprep.subr.bf16.mxu0 0
        %841 = vmatpush1.bf16.msra.mxu0 %v819
        %842 = vmatprep.subr.bf16.mxu0 0
        %843 = vmatpush2.bf16.msra.mxu0 0
        %844 = vmatprep.subr.bf16.mxu0 0
        %845 = vmatpush2.bf16.msra.mxu0 0
        %846 = vmatprep.subr.bf16.mxu0 0
        %847 = vmatpush2.bf16.msra.mxu0 0
        %848 = vmatprep.subr.bf16.mxu0 0
        %849 = vmatpush2.bf16.msra.mxu0 0
        %850 = vmatprep.subr.bf16.mxu0 0
        %851 = vmatpush2.bf16.msra.mxu0 0
        %852 = vmatprep.subr.bf16.mxu0 0
        %853 = vmatpush2.bf16.msra.mxu0 0
        %854 = vmatprep.subr.bf16.mxu0 0
        %855 = vmatpush2.bf16.msra.mxu0 0
        %856 = vmatprep.subr.bf16.mxu0 0
        %857 = vmatpush2.bf16.msra.mxu0 0
        %858 = vmatprep.mubr.bf16.mxu0 0
        %859 = vmatmul.mubr.bf16.gmra.mxu0 %v824
        %v860 = vpop.f32.mrf.mxu0
        %v861 = vadd.f32 %v809, %v860
        %v862 = vpop.f32.mrf.mxu0
        %v863 = vpop.f32.mrf.mxu0
        %v864 = vpop.f32.mrf.mxu0
        %865 = vdwg.mxu0
        %v866 = vld [vmem:[%s548] sm:$0xff]
        %v867 = vpack.c.bf16 %v866, %v866
        %v868 = vld [vmem:[#allocation11] sm:$0xf]
        %v869 = vld [vmem:[#allocation11 + $0x4] sm:$0xf]
        %v870 = vld [vmem:[#allocation11 + $0x8] sm:$0xf]
        %v871 = vld [vmem:[#allocation11 + $0xc] sm:$0xf]
        %v872 = vld [vmem:[%s8] sm:$0x1]
        %v874 = vlaneseq
        %v875 = vshrl.u32 %v874, 7
        %v876 = vsub.s32 0, %v875
        %v877 = vrot.slane %v872, %v876
        %v883 = vunpack.c.l.b16 %v868
        %v884 = vunpack.c.l.b16 %v869
        %v885 = vunpack.c.l.b16 %v870
        %v886 = vunpack.c.l.b16 %v871
        %v887 = vpack.c.b16 %v884, %v883
        %v888 = vpack.c.b16 %v886, %v885
        %v892 = vsel %vm641, %v867, 0
        %894 = vmatprep.subr.bf16.mxu0 0
        %895 = vmatpush1.bf16.msra.mxu0 0
        %896 = vmatprep.subr.bf16.mxu0 0
        %897 = vmatpush1.bf16.msra.mxu0 0
        %898 = vmatprep.subr.bf16.mxu0 0
        %899 = vmatpush1.bf16.msra.mxu0 0
        %900 = vmatprep.subr.bf16.mxu0 0
        %901 = vmatpush1.bf16.msra.mxu0 0
        %902 = vmatprep.subr.bf16.mxu0 0
        %903 = vmatpush1.bf16.msra.mxu0 0
        %904 = vmatprep.subr.bf16.mxu0 0
        %905 = vmatpush1.bf16.msra.mxu0 0
        %906 = vmatprep.subr.bf16.mxu0 0
        %907 = vmatpush1.bf16.msra.mxu0 %v888
        %908 = vmatprep.subr.bf16.mxu0 0
        %909 = vmatpush1.bf16.msra.mxu0 %v887
        %910 = vmatprep.subr.bf16.mxu0 0
        %911 = vmatpush2.bf16.msra.mxu0 0
        %912 = vmatprep.subr.bf16.mxu0 0
        %913 = vmatpush2.bf16.msra.mxu0 0
        %914 = vmatprep.subr.bf16.mxu0 0
        %915 = vmatpush2.bf16.msra.mxu0 0
        %916 = vmatprep.subr.bf16.mxu0 0
        %917 = vmatpush2.bf16.msra.mxu0 0
        %918 = vmatprep.subr.bf16.mxu0 0
        %919 = vmatpush2.bf16.msra.mxu0 0
        %920 = vmatprep.subr.bf16.mxu0 0
        %921 = vmatpush2.bf16.msra.mxu0 0
        %922 = vmatprep.subr.bf16.mxu0 0
        %923 = vmatpush2.bf16.msra.mxu0 0
        %924 = vmatprep.subr.bf16.mxu0 0
        %925 = vmatpush2.bf16.msra.mxu0 0
        %926 = vmatprep.mubr.bf16.mxu0 0
        %927 = vmatmul.mubr.bf16.gmra.mxu0 %v892
        %v928 = vpop.f32.mrf.mxu0
        %v929 = vadd.f32 %v877, %v928
        %v930 = vpop.f32.mrf.mxu0
        %v931 = vpop.f32.mrf.mxu0
        %v932 = vpop.f32.mrf.mxu0
        %933 = vdwg.mxu0
        %v934 = vpack.c.bf16 %v861, %v861
        %935 = vst.msk [vmem:[%s613] sm:$0xf] %vm796, %v934
        %v936 = vpack.c.bf16 %v929, %v929
        %937 = vst.msk [vmem:[%s620] sm:$0xf] %vm796, %v936
        %s938 = sand.u32 %s295, 1
        %s939 = scalar_lea.sflag [#allocation4], %s938
        %s940 = sand.u32 %s295, 1
        %s941 = smul.addr %s940, 4
        %s942 = scalar_lea.vmem [#allocation13], %s941
        %s943 = sand.u32 %s42, 1
        %s944 = scalar_lea.sflag [#allocation15], %s943
        %s945 = sand.u32 %s323, 1
        %s946 = smul.addr %s945, 4
        %s947 = scalar_lea.vmem [#allocation14], %s946
        %s948 = sand.u32 %s42, 1
        %s949 = scalar_lea.sflag [#allocation15], %s948
        %s950 = sand.u32 %s351, 1
        %s951 = smul.addr %s950, 4
        %s952 = scalar_lea.vmem [#allocation16], %s951
        %s953 = sand.u32 %s379, 1
        %s954 = scalar_lea.sflag [#allocation18], %s953
        %s955 = sand.u32 %s379, 1
        %s956 = smul.addr %s955, 4
        %s957 = scalar_lea.vmem [#allocation17], %s956
        // Predicated region
        $region85: #{tpu_custom_call.1} parent=59 // pred_check
          %p958 = pneg %p305
        $region86: #{tpu_custom_call.1} parent=59 // pred_check_branch
          %960 = sbr.rel (%p958) target = $region88
        $region87: #{tpu_custom_call.1} parent=59 // pred_region
          %s962 = ssub.s32 64, 64
          %963 = vsyncadd %s939, %s962
          %s964 = sadd.s32 %s47, %s46
          %s965 = smul.addr %s964, 64
          %s966 = scalar_lea.hbm %s10, %s965
          %s968 = sshll.u32 %s942, 4
          %s969 = int_to_ptr.vmem [resolvable:$true] %s968
          %971 = dma.vmem_to_hbm [thread:$0]  %s969, 64, %s966, %s939
        $region88: #{tpu_custom_call.1} parent=59 // pred_fallthru
          _
        // Predicated region
        $region89: #{tpu_custom_call.1} parent=59 // pred_check
          %p972 = pneg %p333
        $region90: #{tpu_custom_call.1} parent=59 // pred_check_branch
          %974 = sbr.rel (%p972) target = $region92
        $region91: #{tpu_custom_call.1} parent=59 // pred_region
          %s976 = ssub.s32 64, 64
          %977 = vsyncadd %s944, %s976
          %s978 = sadd.s32 %s47, %s46
          %s979 = smul.addr %s978, 64
          %s980 = scalar_lea.hbm %s11, %s979
          %s982 = sshll.u32 %s947, 4
          %s983 = int_to_ptr.vmem [resolvable:$true] %s982
          %985 = dma.vmem_to_hbm [thread:$0]  %s983, 64, %s980, %s944
        $region92: #{tpu_custom_call.1} parent=59 // pred_fallthru
          _
        // Predicated region
        $region93: #{tpu_custom_call.1} parent=59 // pred_check
          %p986 = pneg %p361
        $region94: #{tpu_custom_call.1} parent=59 // pred_check_branch
          %988 = sbr.rel (%p986) target = $region96
        $region95: #{tpu_custom_call.1} parent=59 // pred_region
          %s990 = ssub.s32 64, 64
          %991 = vsyncadd %s949, %s990
          %s992 = sadd.s32 %s47, %s46
          %s993 = smul.addr %s992, 64
          %s994 = scalar_lea.hbm %s12, %s993
          %s996 = sshll.u32 %s952, 4
          %s997 = int_to_ptr.vmem [resolvable:$true] %s996
          %999 = dma.vmem_to_hbm [thread:$0]  %s997, 64, %s994, %s949
        $region96: #{tpu_custom_call.1} parent=59 // pred_fallthru
          _
        // Predicated region
        $region97: #{tpu_custom_call.1} parent=59 // pred_check
          %p1000 = pneg %p389
        $region98: #{tpu_custom_call.1} parent=59 // pred_check_branch
          %1002 = sbr.rel (%p1000) target = $region100
        $region99: #{tpu_custom_call.1} parent=59 // pred_region
          %s1004 = ssub.s32 64, 64
          %1005 = vsyncadd %s954, %s1004
          %s1006 = sadd.s32 %s47, %s46
          %s1007 = smul.addr %s1006, 64
          %s1008 = scalar_lea.hbm %s13, %s1007
          %s1010 = sshll.u32 %s957, 4
          %s1011 = int_to_ptr.vmem [resolvable:$true] %s1010
          %1013 = dma.vmem_to_hbm [thread:$0]  %s1011, 64, %s1008, %s954
        $region100: #{tpu_custom_call.1} parent=59 // pred_fallthru
          _
      $region60: #{tpu_custom_call.1} parent=5 // pred_fallthru
        _
      %p1014 = scmp.le.s32.totalorder 2, %s37
      // Predicated region
      $region101: #{tpu_custom_call.1} parent=5 // pred_check
        %p1015 = pneg %p1014
      $region102: #{tpu_custom_call.1} parent=5 // pred_check_branch
        %1017 = sbr.rel (%p1015) target = $region104
      $region103: #{tpu_custom_call.1} parent=5 // pred_region
        %s1018 = ssub.s32 %s37, 2
        // Predicated region
        $region105: #{tpu_custom_call.1} parent=103 // pred_check
          %p1019 = pneg %p311
        $region106: #{tpu_custom_call.1} parent=103 // pred_check_branch
          %1021 = sbr.rel (%p1019) target = $region108
        $region107: #{tpu_custom_call.1} parent=103 // pred_region
          %s1022 = sand.u32 %s296, 1
          %s1023 = scalar_lea.sflag [#allocation4], %s1022
          %s1024 = sand.u32 %s296, 1
          %s1025 = smul.addr %s1024, 4
          %s1026 = scalar_lea.vmem [#allocation13], %s1025
          %1027 = dma.done %s1023, 64
        $region108: #{tpu_custom_call.1} parent=103 // pred_fallthru
          _
        // Predicated region
        $region109: #{tpu_custom_call.1} parent=103 // pred_check
          %p1028 = pneg %p339
        $region110: #{tpu_custom_call.1} parent=103 // pred_check_branch
          %1030 = sbr.rel (%p1028) target = $region112
        $region111: #{tpu_custom_call.1} parent=103 // pred_region
          %s1031 = sand.u32 %s43, 1
          %s1032 = scalar_lea.sflag [#allocation15], %s1031
          %s1033 = sand.u32 %s324, 1
          %s1034 = smul.addr %s1033, 4
          %s1035 = scalar_lea.vmem [#allocation14], %s1034
          %1036 = dma.done %s1032, 64
        $region112: #{tpu_custom_call.1} parent=103 // pred_fallthru
          _
        // Predicated region
        $region113: #{tpu_custom_call.1} parent=103 // pred_check
          %p1037 = pneg %p367
        $region114: #{tpu_custom_call.1} parent=103 // pred_check_branch
          %1039 = sbr.rel (%p1037) target = $region116
        $region115: #{tpu_custom_call.1} parent=103 // pred_region
          %s1040 = sand.u32 %s43, 1
          %s1041 = scalar_lea.sflag [#allocation15], %s1040
          %s1042 = sand.u32 %s352, 1
          %s1043 = smul.addr %s1042, 4
          %s1044 = scalar_lea.vmem [#allocation16], %s1043
          %1045 = dma.done %s1041, 64
        $region116: #{tpu_custom_call.1} parent=103 // pred_fallthru
          _
        // Predicated region
        $region117: #{tpu_custom_call.1} parent=103 // pred_check
          %p1046 = pneg %p395
        $region118: #{tpu_custom_call.1} parent=103 // pred_check_branch
          %1048 = sbr.rel (%p1046) target = $region120
        $region119: #{tpu_custom_call.1} parent=103 // pred_region
          %s1049 = sand.u32 %s380, 1
          %s1050 = scalar_lea.sflag [#allocation18], %s1049
          %s1051 = sand.u32 %s380, 1
          %s1052 = smul.addr %s1051, 4
          %s1053 = scalar_lea.vmem [#allocation17], %s1052
          %1054 = dma.done %s1050, 64
        $region120: #{tpu_custom_call.1} parent=103 // pred_fallthru
          _
      $region104: #{tpu_custom_call.1} parent=5 // pred_fallthru
        _
    $region6: #{tpu_custom_call.1} parent=1 // loop_footer
      %s41 = sadd.s32 1, %s37
    $region7: #{tpu_custom_call.1} parent=1 // loop_footer_branch
      %36 = sbr.rel target = $region3
    $region8: #{tpu_custom_call.1} parent=1 // loop_exit
      _
    %1055 = vsyncpa [#allocation3], 1
    %s1056 = scalar_lea.sflag [#allocation3], 1
    %1057 = vsyncpa %s1056, 1
    %1058 = vsyncpa [#allocation6], 1
    %s1059 = scalar_lea.sflag [#allocation6], 1
    %1060 = vsyncpa %s1059, 1
    %1061 = vsyncpa [#allocation9], 1
    %1062 = vsyncpa [#allocation12], 1
    %1063 = vsyncpa [#allocation4], 1
    %s1064 = scalar_lea.sflag [#allocation4], 1
    %1065 = vsyncpa %s1064, 1
    %1066 = vsyncpa [#allocation15], 1
    %s1067 = scalar_lea.sflag [#allocation15], 1
    %1068 = vsyncpa %s1067, 1
    %1069 = vsyncpa [#allocation18], 1
    %s1070 = scalar_lea.sflag [#allocation18], 1
    %1071 = vsyncpa %s1070, 1

</llo_original>
